<compile_context>
chip_gen: v6e
topology: v6e:2x2x1
jax: 0.10.0
libtpu: 0.0.40
codegen_flags: <defaults>
</compile_context>

<pallas_src>
from functools import partial

import jax
import jax.numpy as jnp
from jax.experimental import pallas as pl
from jax.experimental.pallas import tpu as pltpu


def _round_up(x, m):
    return ((x + m - 1) // m) * m


_ROW_Q = 16  # row-tile quantum (bf16 native sublane tile)
# Conservative tile-VMEM budget: fits v7x's 64 MiB/TC and v5e/v6e's 128 MiB.
_VMEM_BUDGET = 56 * 1024 * 1024


def _tile_vmem_bytes(tm, dp, tn):
    """Estimated VMEM held by the double-buffered blocks + scratch."""
    return (2 * tm * dp * 4          # x row tile (f32)
            + 2 * dp * tn * 2        # normalized W tile (bf16)
            + 2 * tn * 4             # bias tile (f32)
            + 2 * tm * dp * 4        # x_hat output block (f32, resident)
            + 2 * tm * tn * 2        # latent c output block (bf16)
            + tm * dp * 2            # bf16 x scratch
            + 4 * 2 * tm * 4)        # 4 per-row loss outputs (f32)


def _sae_kernel(x_ref, w_ref, b_ref,                       # inputs
                xhat_ref, c_ref, l1_ref, ksse_ref, kcnt_ref, sse_ref,  # outputs
                xlo_ref,                                    # scratch
                *, d_model, compute_dtype):
    """One (row-tile i, dict-tile n) step of the L1 SAE forward."""
    n = pl.program_id(1)                 # dictionary tile ("arbitrary")
    n_last = pl.num_programs(1) - 1
    tm, dp = x_ref.shape

    # ---- per-row-block init on the first dictionary tile --------------------
    @pl.when(n == 0)
    def _init():
        xhat_ref[...] = jnp.zeros_like(xhat_ref)            # decode accumulator
        l1_ref[...] = jnp.zeros_like(l1_ref)                # per-row sum |c|
        xlo_ref[...] = x_ref[...].astype(compute_dtype)     # cast x once / block

    x_lo = xlo_ref[...]                                     # (tm, dp) bf16
    w_lo = w_ref[...]                                       # (dp, tn) bf16

    # encode: ReLU(x @ W + b) -- bf16 MXU operands, f32 accumulation
    pre = jnp.dot(x_lo, w_lo, preferred_element_type=jnp.float32) + b_ref[...]
    c = jnp.maximum(pre, 0.0)                               # (tm, tn) f32
    c_lo = c.astype(compute_dtype)
    c_ref[...] = c_lo                                       # bf16 latent write

    # decode partial: x_hat += c @ W_tile^T, accumulated directly into the
    # VMEM-resident output block; contraction on W's dict axis (no transpose).
    xhat_ref[...] += jax.lax.dot_general(
        c_lo, w_lo,
        dimension_numbers=(((1,), (1,)), ((), ())),
        preferred_element_type=jnp.float32)

    # per-row L1 partial: single lane reduce (XLU slot, free under the MXU).
    # Padded dictionary columns are exactly zero so they contribute nothing.
    l1_ref[...] += jnp.sum(jnp.abs(c), axis=1, keepdims=True)

    # ---- finalize this row block on the last dictionary tile ----------------
    @pl.when(n == n_last)
    def _final():
        x_f32 = x_ref[...]
        x_hat = xhat_ref[...]
        col_ok = jax.lax.broadcasted_iota(jnp.int32, (1, dp), 1) < d_model
        keep = jnp.logical_and(col_ok, x_f32 != -1.0)       # ignored_index = -1
        diff2 = (x_hat - x_f32) ** 2
        ksse_ref[...] = jnp.sum(jnp.where(keep, diff2, 0.0), axis=1, keepdims=True)
        kcnt_ref[...] = jnp.sum(keep.astype(jnp.float32), axis=1, keepdims=True)
        # padded columns have x == x_hat == 0, so no column mask needed here
        sse_ref[...] = jnp.sum(diff2, axis=1, keepdims=True)


def l1_autoencoder_forward(x, w, b, *, recon_alpha=10.0, tm=256, tn=1024,
                           compute_dtype=jnp.bfloat16):
    """x: [bsz, seq, D] f32, w: decoder.weight [D, N], b: encoder_bias [N].

    Returns (sae_out, latent, l1_loss, reconstruction_loss, mse) -- the
    L1ForwardOutput fields plus the return_mse=True extra.  `latent` is
    returned in bfloat16 (the in-kernel L1 / decode math uses f32 / MXU-f32)."""
    bsz, seq, d = x.shape
    n_dict = w.shape[1]
    m = bsz * seq

    dp = _round_up(d, 128)
    np128 = _round_up(n_dict, 128)

    # --- row tile: keep >= 2 row tiles when possible (both v7x TensorCores) --
    tm_eff = min(_round_up(tm, _ROW_Q), _round_up(m, _ROW_Q))
    if tm_eff >= m and m > _ROW_Q:
        tm_eff = _round_up(-(-m // 2), _ROW_Q)

    # --- dict tile: if the whole dictionary fits the budget, fetch W once ----
    if _tile_vmem_bytes(tm_eff, dp, np128) <= _VMEM_BUDGET:
        tn_eff = np128
    else:
        tn_eff = min(_round_up(tn, 128), np128)
        while tn_eff > 128 and _tile_vmem_bytes(tm_eff, dp, tn_eff) > _VMEM_BUDGET:
            tn_eff -= 128
        while tm_eff > _ROW_Q and _tile_vmem_bytes(tm_eff, dp, tn_eff) > _VMEM_BUDGET:
            tm_eff = max(_ROW_Q, _round_up(tm_eff // 2, _ROW_Q))

    np_pad = _round_up(np128, tn_eff)
    m_pad = _round_up(m, tm_eff)
    mb = m_pad // tm_eff
    nb = np_pad // tn_eff

    # --- prepare operands (pad only when required) ----------------------------
    x2 = x.reshape(m, d).astype(jnp.float32)
    if m_pad != m or dp != d:
        x2 = jnp.pad(x2, ((0, m_pad - m), (0, dp - d)))

    # F.normalize(decoder.weight, dim=0): done once here, not per grid step.
    w32 = w.astype(jnp.float32)
    wn = w32 / jnp.maximum(jnp.linalg.norm(w32, axis=0, keepdims=True), 1e-12)
    if dp != d or np_pad != n_dict:
        wn = jnp.pad(wn, ((0, dp - d), (0, np_pad - n_dict)))
    wn = wn.astype(compute_dtype)

    b2 = b.astype(jnp.float32)
    if np_pad != n_dict:
        b2 = jnp.pad(b2, (0, np_pad - n_dict))
    b2 = b2.reshape(1, np_pad)

    kern = partial(_sae_kernel, d_model=d, compute_dtype=compute_dtype)

    def row_out():
        return pl.BlockSpec((tm_eff, 1), lambda i, n: (i, 0))

    out_shapes = (
        jax.ShapeDtypeStruct((m_pad, dp), jnp.float32),       # x_hat
        jax.ShapeDtypeStruct((m_pad, np_pad), jnp.bfloat16),  # latent c (bf16)
        jax.ShapeDtypeStruct((m_pad, 1), jnp.float32),        # sum |c| per row
        jax.ShapeDtypeStruct((m_pad, 1), jnp.float32),        # masked SSE per row
        jax.ShapeDtypeStruct((m_pad, 1), jnp.float32),        # keep count per row
        jax.ShapeDtypeStruct((m_pad, 1), jnp.float32),        # plain SSE per row
    )

    # explicit VMEM limit derived from the chosen tiles (>= default, <= 64 MiB)
    vmem_limit = int(min(max(32 * 1024 * 1024,
                             int(1.25 * _tile_vmem_bytes(tm_eff, dp, tn_eff))
                             + (2 << 20)),
                         64 * 1024 * 1024))

    xhat2, c2, l1_rows, ksse, kcnt, sse = pl.pallas_call(
        kern,
        out_shape=out_shapes,
        grid_spec=pltpu.PrefetchScalarGridSpec(
            num_scalar_prefetch=0,
            grid=(mb, nb),
            in_specs=[
                pl.BlockSpec((tm_eff, dp), lambda i, n: (i, 0)),    # x row tile
                pl.BlockSpec((dp, tn_eff), lambda i, n: (0, n)),    # normalized W
                pl.BlockSpec((1, tn_eff), lambda i, n: (0, n)),     # bias tile
            ],
            out_specs=[
                pl.BlockSpec((tm_eff, dp), lambda i, n: (i, 0)),       # x_hat
                pl.BlockSpec((tm_eff, tn_eff), lambda i, n: (i, n)),   # latent c
                row_out(), row_out(), row_out(), row_out(),
            ],
            scratch_shapes=[
                pltpu.VMEM((tm_eff, dp), compute_dtype),  # bf16 x, cast once/block
            ],
        ),
        compiler_params=pltpu.CompilerParams(
            dimension_semantics=("parallel", "arbitrary"),
            vmem_limit_bytes=vmem_limit),
    )(x2, wn, b2)

    # --- finalize losses from tiny per-row partials ---------------------------
    l1_loss = jnp.sum(l1_rows[:m, 0]) / m                       # mean row L1 norm
    recon_loss = recon_alpha * jnp.sum(ksse[:m, 0]) / jnp.maximum(
        jnp.sum(kcnt[:m, 0]), 1.0)                              # alpha * masked MSE
    mse = jnp.sum(sse[:m, 0]) / (m * d)                         # plain MSE

    if m_pad != m or dp != d:
        xhat2 = xhat2[:m, :d]
    if m_pad != m or np_pad != n_dict:
        c2 = c2[:m, :n_dict]
    sae_out = xhat2.reshape(bsz, seq, d)
    latent = c2.reshape(bsz, seq, n_dict)
    return sae_out, latent, l1_loss, recon_loss, mse


def _reference(x, w, b, recon_alpha, compute_dtype):
    """Pure-JAX replica of the PyTorch forward (same bf16 operand precision)."""
    wn = w / jnp.maximum(jnp.linalg.norm(w, axis=0, keepdims=True), 1e-12)
    wn_lo = wn.astype(compute_dtype)
    bsz, seq, d = x.shape
    x2 = x.reshape(-1, d)
    pre = jnp.dot(x2.astype(compute_dtype), wn_lo,
                  preferred_element_type=jnp.float32) + b
    c = jax.nn.relu(pre)
    x_hat = jax.lax.dot_general(c.astype(compute_dtype), wn_lo,
                                (((1,), (1,)), ((), ())),
                                preferred_element_type=jnp.float32)
    c = c.reshape(bsz, seq, -1)
    x_hat = x_hat.reshape(bsz, seq, d)
    l1 = jnp.abs(c).sum(-1).mean()
    keep = x != -1.0
    recon = recon_alpha * jnp.sum(jnp.where(keep, (x_hat - x) ** 2, 0.0)) / jnp.sum(keep)
    mse = jnp.mean((x_hat - x) ** 2)
    return x_hat, c, l1, recon, mse


if __name__ == "__main__":
    # Small shapes implied by the module: activation_size=32, expansion_factor=2
    bsz, seq, act_size = 2, 8, 32
    expansion_factor = 2
    n_dict = act_size * expansion_factor            # get_n_dict_components
    recon_alpha = 10.0                              # cfg.recon_alpha

    k_x, k_w, k_b = jax.random.split(jax.random.PRNGKey(0), 3)
    x = jax.random.normal(k_x, (bsz, seq, act_size), jnp.float32)
    # a few exact -1.0 sentinels to exercise mse_loss(..., ignored_index=-1)
    x = x.at[0, 0, :4].set(-1.0)

    # Deterministic "orthogonal_"-style init of decoder.weight [D, N]
    a = jax.random.normal(k_w, (n_dict, act_size), jnp.float32)
    q, _ = jnp.linalg.qr(a)                         # (N, D) orthonormal columns
    w = q.T                                         # (D, N)
    b = 0.05 * jax.random.normal(k_b, (n_dict,), jnp.float32)

    sae_out, latent, l1_loss, recon_loss, mse = jax.block_until_ready(
        l1_autoencoder_forward(x, w, b, recon_alpha=recon_alpha))

    # Verify against a pure-JAX reference of the PyTorch semantics.
    xr, cr, l1r, rr, mr = _reference(x, w, b, recon_alpha, jnp.bfloat16)
    assert sae_out.shape == (bsz, seq, act_size)
    assert latent.shape == (bsz, seq, n_dict)
    assert jnp.allclose(sae_out, xr, atol=2e-3, rtol=2e-3)
    # latent is stored in bf16 by the kernel -> compare with bf16-level tolerance
    assert jnp.allclose(latent.astype(jnp.float32), cr, atol=1e-2, rtol=2e-2)
    assert jnp.allclose(l1_loss, l1r, atol=5e-3, rtol=5e-3)
    assert jnp.allclose(recon_loss, rr, atol=5e-3, rtol=5e-3)
    assert jnp.allclose(mse, mr, atol=5e-3, rtol=5e-3)

    print("KERNEL_OK")
</pallas_src>

<mosaic_0001>
module attributes {stable_mosaic.version = 11 : i64} {
  func.func @_sae_kernel(%arg0: i32, %arg1: i32, %arg2: memref<16x128xf32, #tpu.memory_space<vmem>>, %arg3: memref<128x128xbf16, #tpu.memory_space<vmem>>, %arg4: memref<1x128xf32, #tpu.memory_space<vmem>>, %arg5: memref<16x128xf32, #tpu.memory_space<vmem>>, %arg6: memref<16x128xbf16, #tpu.memory_space<vmem>>, %arg7: memref<16x1xf32, #tpu.memory_space<vmem>>, %arg8: memref<16x1xf32, #tpu.memory_space<vmem>>, %arg9: memref<16x1xf32, #tpu.memory_space<vmem>>, %arg10: memref<16x1xf32, #tpu.memory_space<vmem>>, %arg11: memref<16x128xbf16, #tpu.memory_space<vmem>>) attributes {dimension_semantics = [#tpu.dimension_semantics<parallel>, #tpu.dimension_semantics<arbitrary>], iteration_bounds = array<i64: 1, 1>, scalar_prefetch = 0 : i64, scratch_operands = 1 : i64, tpu.core_type = #tpu.core_type<tc>, window_params = [{transform_indices = @transform_0, window_bounds = array<i64: 16, 128>}, {transform_indices = @transform_1, window_bounds = array<i64: 128, 128>}, {transform_indices = @transform_2, window_bounds = array<i64: 1, 128>}, {transform_indices = @transform_3, window_bounds = array<i64: 16, 128>}, {transform_indices = @transform_4, window_bounds = array<i64: 16, 128>}, {transform_indices = @transform_5, window_bounds = array<i64: 16, 1>}, {transform_indices = @transform_6, window_bounds = array<i64: 16, 1>}, {transform_indices = @transform_7, window_bounds = array<i64: 16, 1>}, {transform_indices = @transform_8, window_bounds = array<i64: 16, 1>}]} {
    %c0_i32 = arith.constant 0 : i32
    %0 = arith.cmpi eq, %arg1, %c0_i32 : i32
    %1 = arith.extui %0 : i1 to i32
    %c0_i32_0 = arith.constant 0 : i32
    %2 = arith.cmpi ne, %1, %c0_i32_0 : i32
    scf.if %2 {
      %cst_21 = arith.constant 0.000000e+00 : f32
      %26 = vector.broadcast %cst_21 : f32 to vector<16x128xf32>
      %c0_22 = arith.constant 0 : index
      %c0_23 = arith.constant 0 : index
      %27 = vector.load %arg5[%c0_22, %c0_23] : memref<16x128xf32, #tpu.memory_space<vmem>>, vector<16x128xf32>
      tpu.vector_store %arg5[%c0_22, %c0_23], %26 {strides = array<i32>} : memref<16x128xf32, #tpu.memory_space<vmem>>, vector<16x128xf32>,
      %cst_24 = arith.constant 0.000000e+00 : f32
      %28 = vector.broadcast %cst_24 : f32 to vector<16x1xf32>
      %c0_25 = arith.constant 0 : index
      %c0_26 = arith.constant 0 : index
      %29 = vector.load %arg7[%c0_25, %c0_26] : memref<16x1xf32, #tpu.memory_space<vmem>>, vector<16x1xf32>
      tpu.vector_store %arg7[%c0_25, %c0_26], %28 {strides = array<i32>} : memref<16x1xf32, #tpu.memory_space<vmem>>, vector<16x1xf32>,
      %c0_27 = arith.constant 0 : index
      %c0_28 = arith.constant 0 : index
      %30 = vector.load %arg2[%c0_27, %c0_28] : memref<16x128xf32, #tpu.memory_space<vmem>>, vector<16x128xf32>
      %31 = arith.truncf %30 : vector<16x128xf32> to vector<16x128xbf16>
      %c0_29 = arith.constant 0 : index
      %c0_30 = arith.constant 0 : index
      %32 = vector.load %arg11[%c0_29, %c0_30] : memref<16x128xbf16, #tpu.memory_space<vmem>>, vector<16x128xbf16>
      tpu.vector_store %arg11[%c0_29, %c0_30], %31 {strides = array<i32>} : memref<16x128xbf16, #tpu.memory_space<vmem>>, vector<16x128xbf16>,
    } else {
    }
    %c0 = arith.constant 0 : index
    %c0_1 = arith.constant 0 : index
    %3 = vector.load %arg11[%c0, %c0_1] : memref<16x128xbf16, #tpu.memory_space<vmem>>, vector<16x128xbf16>
    %c0_2 = arith.constant 0 : index
    %c0_3 = arith.constant 0 : index
    %4 = vector.load %arg3[%c0_2, %c0_3] : memref<128x128xbf16, #tpu.memory_space<vmem>>, vector<128x128xbf16>
    %cst = arith.constant dense<0.000000e+00> : vector<16x128xf32>
    %5 = tpu.matmul %3, %4, %cst {dimension_numbers = #tpu.dot_dimension_numbers<[1], [0], [0], [1], [0, 0, 1, 1], [], []>} : vector<16x128xbf16>, vector<128x128xbf16>, vector<16x128xf32> -> vector<16x128xf32>
    %c0_4 = arith.constant 0 : index
    %c0_5 = arith.constant 0 : index
    %6 = vector.load %arg4[%c0_4, %c0_5] : memref<1x128xf32, #tpu.memory_space<vmem>>, vector<1x128xf32>
    %7 = vector.broadcast %6 : vector<1x128xf32> to vector<16x128xf32>
    %8 = arith.addf %5, %7 : vector<16x128xf32>
    %cst_6 = arith.constant 0.000000e+00 : f32
    %9 = vector.broadcast %cst_6 : f32 to vector<16x128xf32>
    %10 = arith.maximumf %8, %9 : vector<16x128xf32>
    %11 = arith.truncf %10 : vector<16x128xf32> to vector<16x128xbf16>
    %c0_7 = arith.constant 0 : index
    %c0_8 = arith.constant 0 : index
    %12 = vector.load %arg6[%c0_7, %c0_8] : memref<16x128xbf16, #tpu.memory_space<vmem>>, vector<16x128xbf16>
    tpu.vector_store %arg6[%c0_7, %c0_8], %11 {strides = array<i32>} : memref<16x128xbf16, #tpu.memory_space<vmem>>, vector<16x128xbf16>,
    %c0_9 = arith.constant 0 : index
    %c0_10 = arith.constant 0 : index
    %13 = vector.load %arg5[%c0_9, %c0_10] : memref<16x128xf32, #tpu.memory_space<vmem>>, vector<16x128xf32>
    %cst_11 = arith.constant dense<0.000000e+00> : vector<16x128xf32>
    %14 = tpu.matmul %11, %4, %cst_11 {dimension_numbers = #tpu.dot_dimension_numbers<[1], [1], [0], [0], [0, 0, 1, 0], [], []>} : vector<16x128xbf16>, vector<128x128xbf16>, vector<16x128xf32> -> vector<16x128xf32>
    %15 = arith.addf %13, %14 : vector<16x128xf32>
    %c0_12 = arith.constant 0 : index
    %c0_13 = arith.constant 0 : index
    %16 = vector.load %arg5[%c0_12, %c0_13] : memref<16x128xf32, #tpu.memory_space<vmem>>, vector<16x128xf32>
    tpu.vector_store %arg5[%c0_12, %c0_13], %15 {strides = array<i32>} : memref<16x128xf32, #tpu.memory_space<vmem>>, vector<16x128xf32>,
    %c0_14 = arith.constant 0 : index
    %c0_15 = arith.constant 0 : index
    %17 = vector.load %arg7[%c0_14, %c0_15] : memref<16x1xf32, #tpu.memory_space<vmem>>, vector<16x1xf32>
    %18 = math.absf %10 : vector<16x128xf32>
    %cst_16 = arith.constant dense<0.000000e+00> : vector<16xf32>
    %19 = vector.multi_reduction <add>, %18, %cst_16 [1] : vector<16x128xf32> to vector<16xf32>
    %20 = vector.shape_cast %19 : vector<16xf32> to vector<16x1xf32>
    %21 = arith.addf %17, %20 : vector<16x1xf32>
    %c0_17 = arith.constant 0 : index
    %c0_18 = arith.constant 0 : index
    %22 = vector.load %arg7[%c0_17, %c0_18] : memref<16x1xf32, #tpu.memory_space<vmem>>, vector<16x1xf32>
    tpu.vector_store %arg7[%c0_17, %c0_18], %21 {strides = array<i32>} : memref<16x1xf32, #tpu.memory_space<vmem>>, vector<16x1xf32>,
    %c0_i32_19 = arith.constant 0 : i32
    %23 = arith.cmpi eq, %arg1, %c0_i32_19 : i32
    %24 = arith.extui %23 : i1 to i32
    %c0_i32_20 = arith.constant 0 : i32
    %25 = arith.cmpi ne, %24, %c0_i32_20 : i32
    scf.if %25 {
      %c0_21 = arith.constant 0 : index
      %c0_22 = arith.constant 0 : index
      %26 = vector.load %arg2[%c0_21, %c0_22] : memref<16x128xf32, #tpu.memory_space<vmem>>, vector<16x128xf32>
      %c0_23 = arith.constant 0 : index
      %c0_24 = arith.constant 0 : index
      %27 = vector.load %arg5[%c0_23, %c0_24] : memref<16x128xf32, #tpu.memory_space<vmem>>, vector<16x128xf32>
      %28 = tpu.iota {dimensions = array<i32: 1>} : vector<1x128xi32>
      %c32_i32 = arith.constant 32 : i32
      %29 = vector.broadcast %c32_i32 : i32 to vector<1x128xi32>
      %30 = arith.cmpi slt, %28, %29 : vector<1x128xi32>
      %cst_25 = arith.constant -1.000000e+00 : f32
      %31 = vector.broadcast %cst_25 : f32 to vector<16x128xf32>
      %32 = arith.cmpf one, %26, %31 : vector<16x128xf32>
      %33 = vector.broadcast %30 : vector<1x128xi1> to vector<16x128xi1>
      %34 = arith.andi %33, %32 : vector<16x128xi1>
      %35 = arith.subf %27, %26 : vector<16x128xf32>
      %36 = arith.mulf %35, %35 : vector<16x128xf32>
      %cst_26 = arith.constant 0.000000e+00 : f32
      %37 = vector.broadcast %cst_26 : f32 to vector<16x128xf32>
      %38 = arith.select %34, %36, %37 : vector<16x128xi1>, vector<16x128xf32>
      %cst_27 = arith.constant dense<0.000000e+00> : vector<16xf32>
      %39 = vector.multi_reduction <add>, %38, %cst_27 [1] : vector<16x128xf32> to vector<16xf32>
      %40 = vector.shape_cast %39 : vector<16xf32> to vector<16x1xf32>
      %c0_28 = arith.constant 0 : index
      %c0_29 = arith.constant 0 : index
      %41 = vector.load %arg8[%c0_28, %c0_29] : memref<16x1xf32, #tpu.memory_space<vmem>>, vector<16x1xf32>
      tpu.vector_store %arg8[%c0_28, %c0_29], %40 {strides = array<i32>} : memref<16x1xf32, #tpu.memory_space<vmem>>, vector<16x1xf32>,
      %42 = arith.extui %34 : vector<16x128xi1> to vector<16x128xi32>
      %43 = arith.sitofp %42 : vector<16x128xi32> to vector<16x128xf32>
      %cst_30 = arith.constant dense<0.000000e+00> : vector<16xf32>
      %44 = vector.multi_reduction <add>, %43, %cst_30 [1] : vector<16x128xf32> to vector<16xf32>
      %45 = vector.shape_cast %44 : vector<16xf32> to vector<16x1xf32>
      %c0_31 = arith.constant 0 : index
      %c0_32 = arith.constant 0 : index
      %46 = vector.load %arg9[%c0_31, %c0_32] : memref<16x1xf32, #tpu.memory_space<vmem>>, vector<16x1xf32>
      tpu.vector_store %arg9[%c0_31, %c0_32], %45 {strides = array<i32>} : memref<16x1xf32, #tpu.memory_space<vmem>>, vector<16x1xf32>,
      %cst_33 = arith.constant dense<0.000000e+00> : vector<16xf32>
      %47 = vector.multi_reduction <add>, %36, %cst_33 [1] : vector<16x128xf32> to vector<16xf32>
      %48 = vector.shape_cast %47 : vector<16xf32> to vector<16x1xf32>
      %c0_34 = arith.constant 0 : index
      %c0_35 = arith.constant 0 : index
      %49 = vector.load %arg10[%c0_34, %c0_35] : memref<16x1xf32, #tpu.memory_space<vmem>>, vector<16x1xf32>
      tpu.vector_store %arg10[%c0_34, %c0_35], %48 {strides = array<i32>} : memref<16x1xf32, #tpu.memory_space<vmem>>, vector<16x1xf32>,
    } else {
    }
    return
  }
  func.func @transform_0(%arg0: i32, %arg1: i32) -> (i32, i32) {
    %c0_i32 = arith.constant 0 : i32
    %c0_i32_0 = arith.constant 0 : i32
    return %arg0, %c0_i32 : i32, i32
  }
  func.func @transform_1(%arg0: i32, %arg1: i32) -> (i32, i32) {
    %c0_i32 = arith.constant 0 : i32
    %c0_i32_0 = arith.constant 0 : i32
    return %c0_i32, %arg1 : i32, i32
  }
  func.func @transform_2(%arg0: i32, %arg1: i32) -> (i32, i32) {
    %c0_i32 = arith.constant 0 : i32
    %c0_i32_0 = arith.constant 0 : i32
    return %c0_i32, %arg1 : i32, i32
  }
  func.func @transform_3(%arg0: i32, %arg1: i32) -> (i32, i32) {
    %c0_i32 = arith.constant 0 : i32
    %c0_i32_0 = arith.constant 0 : i32
    return %arg0, %c0_i32 : i32, i32
  }
  func.func @transform_4(%arg0: i32, %arg1: i32) -> (i32, i32) {
    %c0_i32 = arith.constant 0 : i32
    return %arg0, %arg1 : i32, i32
  }
  func.func @transform_5(%arg0: i32, %arg1: i32) -> (i32, i32) {
    %c0_i32 = arith.constant 0 : i32
    %c0_i32_0 = arith.constant 0 : i32
    return %arg0, %c0_i32 : i32, i32
  }
  func.func @transform_6(%arg0: i32, %arg1: i32) -> (i32, i32) {
    %c0_i32 = arith.constant 0 : i32
    %c0_i32_0 = arith.constant 0 : i32
    return %arg0, %c0_i32 : i32, i32
  }
  func.func @transform_7(%arg0: i32, %arg1: i32) -> (i32, i32) {
    %c0_i32 = arith.constant 0 : i32
    %c0_i32_0 = arith.constant 0 : i32
    return %arg0, %c0_i32 : i32, i32
  }
  func.func @transform_8(%arg0: i32, %arg1: i32) -> (i32, i32) {
    %c0_i32 = arith.constant 0 : i32
    %c0_i32_0 = arith.constant 0 : i32
    return %arg0, %c0_i32 : i32, i32
  }
}

</mosaic_0001>

<llo_original>
// kernel: tpu_custom_call.1
$region0: #{tpu_custom_call.1}
  #allocation0 [shape = 'u32[]', space=smem, size = 0x4, offset = 0x4, fixed_abs, tag = 'smem constant byte address 0x4 - core index']
  #allocation1 [shape = 'u32[144,128]{1,0:T(1,128)}', space=vmem, size = 0x12000, scoped, tag = 'internal scratch']
  #allocation2 [shape = 'bf16[16,128]{1,0:T(8,128)(2,1)}', space=vmem, size = 0x1000, scoped, tag = 'scratch operand']
  %s0 = inlined_call_operand.hbm [shape: f32[16,128], index: 0, kind: input, shape index: {}]
  %s1 = inlined_call_operand.hbm [shape: bf16[128,128], index: 1, kind: input, shape index: {}]
  %s2 = inlined_call_operand.vmem [shape: f32[1,128], index: 2, kind: input, shape index: {}]
  %s3 = inlined_call_operand.hbm [shape: f32[16,128], index: 3, kind: output, shape index: {0}]
  %s4 = inlined_call_operand.hbm [shape: bf16[16,128], index: 4, kind: output, shape index: {1}]
  %s5 = inlined_call_operand.vmem [shape: f32[16,1], index: 5, kind: output, shape index: {2}]
  %s6 = inlined_call_operand.vmem [shape: f32[16,1], index: 6, kind: output, shape index: {3}]
  %s7 = inlined_call_operand.vmem [shape: f32[16,1], index: 7, kind: output, shape index: {4}]
  %s8 = inlined_call_operand.vmem [shape: f32[16,1], index: 8, kind: output, shape index: {5}]
  %9 = xla_tuple %s3, %s4, %s5, %s6, %s7, %s8
  %s10 = sld [smem:[#allocation0]]
  $region78: #{tpu_custom_call.1} parent=0
    _
  %s12 = ssub.s32 1, %s10
  %s13 = scalar_select 0, %s12, %s10
  $region1: #{tpu_custom_call.1} parent=0
    #allocation3 [shape = 'u8[8192]{0}', space=vmem, size = 0x2000, scoped, tag = 'input window, operand 0, single buffered']
    #allocation4 [shape = 's32[1]{0}', space=sflag, size = 0x4, scoped, tag = 'scoped memory for tpu_custom_call.1']
    #allocation5 [shape = 's32[1]{0}', space=sflag, size = 0x4, scoped, tag = 'scoped memory for tpu_custom_call.1']
    #allocation6 [shape = 'u8[32768]{0}', space=vmem, size = 0x8000, scoped, tag = 'input window, operand 1, single buffered']
    #allocation7 [shape = 's32[1]{0}', space=sflag, size = 0x4, scoped, tag = 'scoped memory for tpu_custom_call.1']
    #allocation8 [shape = 'u8[8192]{0}', space=vmem, size = 0x2000, scoped, tag = 'output window, operand 0, single buffered']
    #allocation9 [shape = 'u8[4096]{0}', space=vmem, size = 0x1000, scoped, tag = 'output window, operand 1, single buffered']
    #allocation10 [shape = 's32[1]{0}', space=sflag, size = 0x4, scoped, tag = 'scoped memory for tpu_custom_call.1']
    %14 = vsyncpa [#allocation4], 0
    %15 = vsyncpa [#allocation7], 0
    %16 = vsyncpa [#allocation5], 0
    %17 = vsyncpa [#allocation10], 0
    // Predicated region
    $region2: #{tpu_custom_call.1} parent=1 // pred_check
      _
    $region3: #{tpu_custom_call.1} parent=1 // pred_check_branch
      %19 = sbr.rel (0) target = $region5
    $region4: #{tpu_custom_call.1} parent=1 // pred_region
      %s21 = ssub.s32 256, 256
      %22 = vsyncadd [#allocation4], %s21
      %s23 = sshll.u32 [#allocation3], 4
      %s24 = int_to_ptr.vmem [resolvable:$true] %s23
      %29 = dma.hbm_to_vmem [thread:$0]  %s0, 256, %s24, [#allocation4], 128, 128, 8
    $region5: #{tpu_custom_call.1} parent=1 // pred_fallthru
      _
    // Predicated region
    $region6: #{tpu_custom_call.1} parent=1 // pred_check
      _
    $region7: #{tpu_custom_call.1} parent=1 // pred_check_branch
      %31 = sbr.rel (0) target = $region9
    $region8: #{tpu_custom_call.1} parent=1 // pred_region
      %s33 = ssub.s32 1024, 1024
      %34 = vsyncadd [#allocation7], %s33
      %s35 = sshll.u32 [#allocation6], 4
      %s36 = int_to_ptr.vmem [resolvable:$true] %s35
      %41 = dma.hbm_to_vmem [thread:$0]  %s1, 1024, %s36, [#allocation7], 64, 64, 4
    $region9: #{tpu_custom_call.1} parent=1 // pred_fallthru
      _
    // Predicated region
    $region10: #{tpu_custom_call.1} parent=1 // pred_check
      _
    $region11: #{tpu_custom_call.1} parent=1 // pred_check_branch
      %43 = sbr.rel (0) target = $region13
    $region12: #{tpu_custom_call.1} parent=1 // pred_region
      _
    $region13: #{tpu_custom_call.1} parent=1 // pred_fallthru
      _
    // Predicated region
    $region14: #{tpu_custom_call.1} parent=1 // pred_check
      _
    $region15: #{tpu_custom_call.1} parent=1 // pred_check_branch
      %45 = sbr.rel (0) target = $region17
    $region16: #{tpu_custom_call.1} parent=1 // pred_region
      %46 = dma.done [#allocation4], 256
    $region17: #{tpu_custom_call.1} parent=1 // pred_fallthru
      _
    // Predicated region
    $region18: #{tpu_custom_call.1} parent=1 // pred_check
      _
    $region19: #{tpu_custom_call.1} parent=1 // pred_check_branch
      %48 = sbr.rel (0) target = $region21
    $region20: #{tpu_custom_call.1} parent=1 // pred_region
      %49 = dma.done [#allocation7], 1024
    $region21: #{tpu_custom_call.1} parent=1 // pred_fallthru
      _
    %p51 = scmp.eq.s32.totalorder 0, 0
    // Predicated region
    $region22: #{tpu_custom_call.1} parent=1 // pred_check
      %p52 = pneg %p51
    $region23: #{tpu_custom_call.1} parent=1 // pred_check_branch
      %54 = sbr.rel (%p52) target = $region25
    $region24: #{tpu_custom_call.1} parent=1 // pred_region
      %55 = vst [vmem:[#allocation8] sm:$0xff] 0.0
      %56 = vst [vmem:[#allocation8 + $0x8] sm:$0xff] 0.0
      %vm57 = vcmask 7168
      %58 = vst.msk [vmem:[%s5] sm:$0xff] %vm57, 0.0
      %59 = vst.msk [vmem:[%s5 + $0x8] sm:$0xff] %vm57, 0.0
      %v60 = vld [vmem:[#allocation3] sm:$0xff]
      %v61 = vld [vmem:[#allocation3 + $0x8] sm:$0xff]
      %v62 = vpack.c.bf16 %v61, %v60
      %v64 = vunpack.c.l.b16 %v62
      %v65 = vunpack.c.h.b16 %v62
      %v66 = vpack.c.b16 %v64, %v64
      %v67 = vpack.c.b16 %v65, %v65
      %70 = vst [vmem:[#allocation2] sm:$0xf] %v66
      %71 = vst [vmem:[#allocation2 + $0x4] sm:$0xf] %v67
    $region25: #{tpu_custom_call.1} parent=1 // pred_fallthru
      _
    %v72 = vld [vmem:[#allocation2] sm:$0xf]
    %v73 = vld [vmem:[#allocation2 + $0x4] sm:$0xf]
    %v74 = vld [vmem:[#allocation6] sm:$0xf]
    %v75 = vld [vmem:[#allocation6 + $0x4] sm:$0xf]
    %v76 = vld [vmem:[#allocation6 + $0x8] sm:$0xf]
    %v77 = vld [vmem:[#allocation6 + $0xc] sm:$0xf]
    %v78 = vld [vmem:[#allocation6 + $0x10] sm:$0xf]
    %v79 = vld [vmem:[#allocation6 + $0x14] sm:$0xf]
    %v80 = vld [vmem:[#allocation6 + $0x18] sm:$0xf]
    %v81 = vld [vmem:[#allocation6 + $0x1c] sm:$0xf]
    %v82 = vld [vmem:[#allocation6 + $0x20] sm:$0xf]
    %v83 = vld [vmem:[#allocation6 + $0x24] sm:$0xf]
    %v84 = vld [vmem:[#allocation6 + $0x28] sm:$0xf]
    %v85 = vld [vmem:[#allocation6 + $0x2c] sm:$0xf]
    %v86 = vld [vmem:[#allocation6 + $0x30] sm:$0xf]
    %v87 = vld [vmem:[#allocation6 + $0x34] sm:$0xf]
    %v88 = vld [vmem:[#allocation6 + $0x38] sm:$0xf]
    %v89 = vld [vmem:[#allocation6 + $0x3c] sm:$0xf]
    %v90 = vld [vmem:[%s2] sm:$0x1]
    %v92 = vlaneseq
    %v93 = vshrl.u32 %v92, 7
    %v94 = vsub.s32 0, %v93
    %v95 = vrot.slane %v90, %v94
    %v99 = vunpack.c.l.b16 %v72
    %v100 = vunpack.c.l.b16 %v73
    %v101 = vpack.c.b16 %v100, %v99
    %v119 = vunpack.c.l.b16 %v74
    %v120 = vunpack.c.l.b16 %v75
    %v121 = vunpack.c.l.b16 %v76
    %v122 = vunpack.c.l.b16 %v77
    %v123 = vunpack.c.l.b16 %v78
    %v124 = vunpack.c.l.b16 %v79
    %v125 = vunpack.c.l.b16 %v80
    %v126 = vunpack.c.l.b16 %v81
    %v127 = vunpack.c.l.b16 %v82
    %v128 = vunpack.c.l.b16 %v83
    %v129 = vunpack.c.l.b16 %v84
    %v130 = vunpack.c.l.b16 %v85
    %v131 = vunpack.c.l.b16 %v86
    %v132 = vunpack.c.l.b16 %v87
    %v133 = vunpack.c.l.b16 %v88
    %v134 = vunpack.c.l.b16 %v89
    %v135 = vpack.c.b16 %v120, %v119
    %v136 = vpack.c.b16 %v122, %v121
    %v137 = vpack.c.b16 %v124, %v123
    %v138 = vpack.c.b16 %v126, %v125
    %v139 = vpack.c.b16 %v128, %v127
    %v140 = vpack.c.b16 %v130, %v129
    %v141 = vpack.c.b16 %v132, %v131
    %v142 = vpack.c.b16 %v134, %v133
    %151 = vmatprep.subr.bf16.mxu0 0
    %152 = vmatpush1.bf16.msra.mxu0 %v142
    %153 = vmatprep.subr.bf16.mxu0 0
    %154 = vmatpush1.bf16.msra.mxu0 %v141
    %155 = vmatprep.subr.bf16.mxu0 0
    %156 = vmatpush1.bf16.msra.mxu0 %v140
    %157 = vmatprep.subr.bf16.mxu0 0
    %158 = vmatpush1.bf16.msra.mxu0 %v139
    %159 = vmatprep.subr.bf16.mxu0 0
    %160 = vmatpush1.bf16.msra.mxu0 %v138
    %161 = vmatprep.subr.bf16.mxu0 0
    %162 = vmatpush1.bf16.msra.mxu0 %v137
    %163 = vmatprep.subr.bf16.mxu0 0
    %164 = vmatpush1.bf16.msra.mxu0 %v136
    %165 = vmatprep.subr.bf16.mxu0 0
    %166 = vmatpush1.bf16.msra.mxu0 %v135
    %167 = vmatprep.subr.bf16.mxu0 0
    %168 = vmatpush2.bf16.msra.mxu0 0
    %169 = vmatprep.subr.bf16.mxu0 0
    %170 = vmatpush2.bf16.msra.mxu0 0
    %171 = vmatprep.subr.bf16.mxu0 0
    %172 = vmatpush2.bf16.msra.mxu0 0
    %173 = vmatprep.subr.bf16.mxu0 0
    %174 = vmatpush2.bf16.msra.mxu0 0
    %175 = vmatprep.subr.bf16.mxu0 0
    %176 = vmatpush2.bf16.msra.mxu0 0
    %177 = vmatprep.subr.bf16.mxu0 0
    %178 = vmatpush2.bf16.msra.mxu0 0
    %179 = vmatprep.subr.bf16.mxu0 0
    %180 = vmatpush2.bf16.msra.mxu0 0
    %181 = vmatprep.subr.bf16.mxu0 0
    %182 = vmatpush2.bf16.msra.mxu0 0
    %183 = vmatprep.mubr.bf16.mxu0 0
    %184 = vmatmul.mubr.bf16.gmra.mxu0 %v101
    %v185 = vpop.f32.mrf.mxu0
    %v186 = vadd.f32 %v95, %v185
    %v187 = vpop.f32.mrf.mxu0
    %v188 = vpop.f32.mrf.mxu0
    %v189 = vadd.f32 %v95, %v188
    %v190 = vpop.f32.mrf.mxu0
    %191 = vdwg.mxu0
    %v192 = vmax.f32 %v186, 0.0
    %v193 = vmax.f32 %v189, 0.0
    %v194 = vpack.c.bf16 %v193, %v192
    %v196 = vunpack.c.l.b16 %v194
    %v197 = vunpack.c.h.b16 %v194
    %v198 = vpack.c.b16 %v196, %v196
    %v199 = vpack.c.b16 %v197, %v197
    %202 = vst [vmem:[#allocation9] sm:$0xf] %v198
    %203 = vst [vmem:[#allocation9 + $0x4] sm:$0xf] %v199
    %v204 = vld [vmem:[#allocation8] sm:$0xff]
    %v205 = vld [vmem:[#allocation8 + $0x8] sm:$0xff]
    %206 = vmatprep.subr.bf16.mxu0 0
    %207 = vmatpush1.bf16.xpose.msra.mxu0 %v142
    %208 = vmatprep.subr.bf16.mxu0 0
    %209 = vmatpush1.bf16.xpose.msra.mxu0 %v141
    %210 = vmatprep.subr.bf16.mxu0 0
    %211 = vmatpush1.bf16.xpose.msra.mxu0 %v140
    %212 = vmatprep.subr.bf16.mxu0 0
    %213 = vmatpush1.bf16.xpose.msra.mxu0 %v139
    %214 = vmatprep.subr.bf16.mxu0 0
    %215 = vmatpush1.bf16.xpose.msra.mxu0 %v138
    %216 = vmatprep.subr.bf16.mxu0 0
    %217 = vmatpush1.bf16.xpose.msra.mxu0 %v137
    %218 = vmatprep.subr.bf16.mxu0 0
    %219 = vmatpush1.bf16.xpose.msra.mxu0 %v136
    %220 = vmatprep.subr.bf16.mxu0 0
    %221 = vmatpush1.bf16.xpose.msra.mxu0 %v135
    %222 = vmatprep.subr.bf16.mxu0 0
    %223 = vmatpush2.bf16.xpose.msra.mxu0 0
    %224 = vmatprep.subr.bf16.mxu0 0
    %225 = vmatpush2.bf16.xpose.msra.mxu0 0
    %226 = vmatprep.subr.bf16.mxu0 0
    %227 = vmatpush2.bf16.xpose.msra.mxu0 0
    %228 = vmatprep.subr.bf16.mxu0 0
    %229 = vmatpush2.bf16.xpose.msra.mxu0 0
    %230 = vmatprep.subr.bf16.mxu0 0
    %231 = vmatpush2.bf16.xpose.msra.mxu0 0
    %232 = vmatprep.subr.bf16.mxu0 0
    %233 = vmatpush2.bf16.xpose.msra.mxu0 0
    %234 = vmatprep.subr.bf16.mxu0 0
    %235 = vmatpush2.bf16.xpose.msra.mxu0 0
    %236 = vmatprep.subr.bf16.mxu0 0
    %237 = vmatpush2.bf16.xpose.msra.mxu0 0
    %238 = vmatprep.mubr.bf16.mxu0 0
    %239 = vmatmul.mubr.bf16.gmra.mxu0 %v194
    %v240 = vpop.f32.mrf.mxu0
    %v241 = vadd.f32 0.0, %v240
    %v242 = vpop.f32.mrf.mxu0
    %v243 = vpop.f32.mrf.mxu0
    %v244 = vadd.f32 0.0, %v243
    %v245 = vpop.f32.mrf.mxu0
    %246 = vdwg.mxu0
    %v247 = vadd.f32 %v204, %v241
    %v248 = vadd.f32 %v205, %v244
    %249 = vst [vmem:[#allocation8] sm:$0xff] %v247
    %250 = vst [vmem:[#allocation8 + $0x8] sm:$0xff] %v248
    %v251 = vld [vmem:[%s5] sm:$0xff]
    %v252 = vld [vmem:[%s5 + $0x8] sm:$0xff]
    %v253 = vand.u32 2147483647, %v192
    %v254 = vand.u32 2147483647, %v193
    %255 = vadd.xlane.f32.xlu0 %v253
    %v256 = vpop.xlane.xlu0 %255
    %257 = vadd.xlane.f32.xlu0 %v254
    %v258 = vpop.xlane.xlu0 %257
    %v259 = vadd.f32 %v251, %v256
    %v260 = vadd.f32 %v252, %v258
    %vm261 = vcmask 7168
    %262 = vst.msk [vmem:[%s5] sm:$0xff] %vm261, %v259
    %263 = vst.msk [vmem:[%s5 + $0x8] sm:$0xff] %vm261, %v260
    // Predicated region
    $region26: #{tpu_custom_call.1} parent=1 // pred_check
      %p264 = pneg %p51
    $region27: #{tpu_custom_call.1} parent=1 // pred_check_branch
      %266 = sbr.rel (%p264) target = $region29
    $region28: #{tpu_custom_call.1} parent=1 // pred_region
      %v267 = vld [vmem:[#allocation3] sm:$0xff]
      %v268 = vld [vmem:[#allocation3 + $0x8] sm:$0xff]
      %v269 = vld [vmem:[#allocation8] sm:$0xff]
      %v270 = vld [vmem:[#allocation8 + $0x8] sm:$0xff]
      %v271 = vlaneseq
      %v272 = vand.u32 %v271, 127
      %vm273 = vcmp.lt.s32.totalorder %v272, 32
      %vm274 = vcmp.ne.f32.partialorder %v267, -1.0
      %vm275 = vcmp.ne.f32.partialorder %v268, -1.0
      %v276 = vsel %vm273, 1, 0
      %vm277 = vcmp.eq.s32.totalorder %v276, 1
      %vm278 = vmand %vm277, %vm274
      %vm279 = vmand %vm277, %vm275
      %v280 = vsub.f32 %v269, %v267
      %v281 = vsub.f32 %v270, %v268
      %v282 = vmul.f32 %v280, %v280
      %v283 = vmul.f32 %v281, %v281
      %v284 = vsel %vm278, %v282, 0.0
      %v285 = vsel %vm279, %v283, 0.0
      %286 = vadd.xlane.f32.xlu0 %v284
      %v287 = vpop.xlane.xlu0 %286
      %288 = vadd.xlane.f32.xlu0 %v285
      %v289 = vpop.xlane.xlu0 %288
      %290 = vst.msk [vmem:[%s6] sm:$0xff] %vm261, %v287
      %291 = vst.msk [vmem:[%s6 + $0x8] sm:$0xff] %vm261, %v289
      %v292 = vsel %vm278, 1, 0
      %v293 = vsel %vm279, 1, 0
      %v294 = vcvt.s32.f32 %v292
      %v295 = vcvt.s32.f32 %v293
      %296 = vadd.xlane.f32.xlu0 %v294
      %v297 = vpop.xlane.xlu0 %296
      %298 = vadd.xlane.f32.xlu0 %v295
      %v299 = vpop.xlane.xlu0 %298
      %300 = vst.msk [vmem:[%s7] sm:$0xff] %vm261, %v297
      %301 = vst.msk [vmem:[%s7 + $0x8] sm:$0xff] %vm261, %v299
      %302 = vadd.xlane.f32.xlu0 %v282
      %v303 = vpop.xlane.xlu0 %302
      %304 = vadd.xlane.f32.xlu0 %v283
      %v305 = vpop.xlane.xlu0 %304
      %306 = vst.msk [vmem:[%s8] sm:$0xff] %vm261, %v303
      %307 = vst.msk [vmem:[%s8 + $0x8] sm:$0xff] %vm261, %v305
    $region29: #{tpu_custom_call.1} parent=1 // pred_fallthru
      _
    // Predicated region
    $region30: #{tpu_custom_call.1} parent=1 // pred_check
      _
    $region31: #{tpu_custom_call.1} parent=1 // pred_check_branch
      %309 = sbr.rel (0) target = $region33
    $region32: #{tpu_custom_call.1} parent=1 // pred_region
      %s311 = ssub.s32 256, 256
      %312 = vsyncadd [#allocation5], %s311
      %s313 = sshll.u32 [#allocation8], 4
      %s314 = int_to_ptr.vmem [resolvable:$true] %s313
      %319 = dma.vmem_to_hbm [thread:$0]  %s314, 256, %s3, [#allocation5], 128, 128, 8
    $region33: #{tpu_custom_call.1} parent=1 // pred_fallthru
      _
    // Predicated region
    $region34: #{tpu_custom_call.1} parent=1 // pred_check
      _
    $region35: #{tpu_custom_call.1} parent=1 // pred_check_branch
      %321 = sbr.rel (0) target = $region37
    $region36: #{tpu_custom_call.1} parent=1 // pred_region
      %s323 = ssub.s32 128, 128
      %324 = vsyncadd [#allocation10], %s323
      %s325 = sshll.u32 [#allocation9], 4
      %s326 = int_to_ptr.vmem [resolvable:$true] %s325
      %331 = dma.vmem_to_hbm [thread:$0]  %s326, 128, %s4, [#allocation10], 64, 64, 4
    $region37: #{tpu_custom_call.1} parent=1 // pred_fallthru
      _
    // Predicated region
    $region38: #{tpu_custom_call.1} parent=1 // pred_check
      _
    $region39: #{tpu_custom_call.1} parent=1 // pred_check_branch
      %333 = sbr.rel (0) target = $region41
    $region40: #{tpu_custom_call.1} parent=1 // pred_region
      _
    $region41: #{tpu_custom_call.1} parent=1 // pred_fallthru
      _
    // Predicated region
    $region42: #{tpu_custom_call.1} parent=1 // pred_check
      _
    $region43: #{tpu_custom_call.1} parent=1 // pred_check_branch
      %335 = sbr.rel (0) target = $region45
    $region44: #{tpu_custom_call.1} parent=1 // pred_region
      _
    $region45: #{tpu_custom_call.1} parent=1 // pred_fallthru
      _
    // Predicated region
    $region46: #{tpu_custom_call.1} parent=1 // pred_check
      _
    $region47: #{tpu_custom_call.1} parent=1 // pred_check_branch
      %337 = sbr.rel (0) target = $region49
    $region48: #{tpu_custom_call.1} parent=1 // pred_region
      _
    $region49: #{tpu_custom_call.1} parent=1 // pred_fallthru
      _
    // Predicated region
    $region50: #{tpu_custom_call.1} parent=1 // pred_check
      _
    $region51: #{tpu_custom_call.1} parent=1 // pred_check_branch
      %339 = sbr.rel (0) target = $region53
    $region52: #{tpu_custom_call.1} parent=1 // pred_region
      _
    $region53: #{tpu_custom_call.1} parent=1 // pred_fallthru
      _
    // Predicated region
    $region54: #{tpu_custom_call.1} parent=1 // pred_check
      _
    $region55: #{tpu_custom_call.1} parent=1 // pred_check_branch
      %341 = sbr.rel (0) target = $region57
    $region56: #{tpu_custom_call.1} parent=1 // pred_region
      %342 = dma.done [#allocation5], 256
    $region57: #{tpu_custom_call.1} parent=1 // pred_fallthru
      _
    // Predicated region
    $region58: #{tpu_custom_call.1} parent=1 // pred_check
      _
    $region59: #{tpu_custom_call.1} parent=1 // pred_check_branch
      %344 = sbr.rel (0) target = $region61
    $region60: #{tpu_custom_call.1} parent=1 // pred_region
      %345 = dma.done [#allocation10], 128
    $region61: #{tpu_custom_call.1} parent=1 // pred_fallthru
      _
    // Predicated region
    $region62: #{tpu_custom_call.1} parent=1 // pred_check
      _
    $region63: #{tpu_custom_call.1} parent=1 // pred_check_branch
      %347 = sbr.rel (0) target = $region65
    $region64: #{tpu_custom_call.1} parent=1 // pred_region
      _
    $region65: #{tpu_custom_call.1} parent=1 // pred_fallthru
      _
    // Predicated region
    $region66: #{tpu_custom_call.1} parent=1 // pred_check
      _
    $region67: #{tpu_custom_call.1} parent=1 // pred_check_branch
      %349 = sbr.rel (0) target = $region69
    $region68: #{tpu_custom_call.1} parent=1 // pred_region
      _
    $region69: #{tpu_custom_call.1} parent=1 // pred_fallthru
      _
    // Predicated region
    $region70: #{tpu_custom_call.1} parent=1 // pred_check
      _
    $region71: #{tpu_custom_call.1} parent=1 // pred_check_branch
      %351 = sbr.rel (0) target = $region73
    $region72: #{tpu_custom_call.1} parent=1 // pred_region
      _
    $region73: #{tpu_custom_call.1} parent=1 // pred_fallthru
      _
    // Predicated region
    $region74: #{tpu_custom_call.1} parent=1 // pred_check
      _
    $region75: #{tpu_custom_call.1} parent=1 // pred_check_branch
      %353 = sbr.rel (0) target = $region77
    $region76: #{tpu_custom_call.1} parent=1 // pred_region
      _
    $region77: #{tpu_custom_call.1} parent=1 // pred_fallthru
      _
    %354 = vsyncpa [#allocation4], 1
    %355 = vsyncpa [#allocation7], 1
    %356 = vsyncpa [#allocation5], 1
    %357 = vsyncpa [#allocation10], 1

</llo_original>
